<compile_context>
chip_gen: v5e
topology: v5e:2x2
jax: 0.10.0
libtpu: 0.0.40
codegen_flags: <defaults>
</compile_context>

<pallas_src>
import jax
import jax.numpy as jnp
import numpy as np
from jax import lax
from jax.experimental import pallas as pl
from jax.experimental.pallas import tpu as pltpu

# ---- small, module-consistent shapes -------------------------------------------------
B, CIN, H, W = 2, 4, 16, 16        # two image batches x1, x2 (NCHW)
K, PAD = 3, 1                      # conv stem kernel / padding
PREV_DIM = 32                      # backbone feature dim (== encoder.fc.weight.shape[1])
DIM = 64                           # SimSiam `dim` (projection output dim)
PRED_DIM = 16                      # SimSiam `pred_dim` (predictor hidden; unused in forward)
VIEWS = 2
HW = H * W
KC = K * K * CIN                   # 36 (raw im2col contraction width, NOT padded in HBM)
ROWS = VIEWS * B * HW              # 1024 (both views fused along rows)
FP = 128                           # lane-padded feature width (covers PREV_DIM and DIM)
BN_EPS = 1e-5
COS_EPS = 1e-8                     # torch.nn.CosineSimilarity default eps

# Row layout of the folded (8, 128) BN scale/shift slab.
_S1, _T1, _S2, _T2, _S3, _T3 = 0, 1, 2, 3, 4, 5
BN_ROWS = 8


# ---- Pallas kernel --------------------------------------------------------------------
def simsiam_kernel(cols_ref, wconv_ref, wpack_ref, bn_ref, out_ref):
    # Synthetic backbone stem: 3x3 conv as im2col matmul (bf16 operands, f32 acc) + ReLU.
    h = jnp.dot(cols_ref[...], wconv_ref[...], preferred_element_type=jnp.float32)
    h = jnp.maximum(h, 0.0)                                            # (ROWS, FP) f32

    # Global average pool: VPU reduction over the (non-minor) HW axis — no MXU, no XLU.
    feats = h.reshape(VIEWS * B, HW, FP).sum(axis=1) * (1.0 / HW)      # (2B, FP) f32

    bn = bn_ref[...]                                                   # (8, FP) f32

    def proj_layer(x, row0, srow, trow, relu):
        # Only 32 contraction rows are real: slice 32 lanes, K=32 bf16 matmul, f32 acc.
        y = jnp.dot(x[:, :PREV_DIM].astype(jnp.bfloat16),
                    wpack_ref[row0:row0 + PREV_DIM, :],
                    preferred_element_type=jnp.float32)
        # BN (and fc bias) pre-folded on the host: one fused multiply-add.
        y = y * bn[srow:srow + 1, :] + bn[trow:trow + 1, :]
        return jnp.maximum(y, 0.0) if relu else y

    # encoder.fc projector: Linear->BN->ReLU, Linear->BN->ReLU, Linear(+bias)->BN(no affine)
    h1 = proj_layer(feats, 0 * PREV_DIM, _S1, _T1, True)
    h2 = proj_layer(h1, 1 * PREV_DIM, _S2, _T2, True)
    z = proj_layer(h2, 2 * PREV_DIM, _S3, _T3, False)                  # padded lanes exactly 0

    # Cosine similarity along dim=1 between the two views (padded lanes are exact zeros,
    # so the 128-lane sums equal the logical 64-dim sums).
    z1 = z[:B, :]
    z2 = z[B:, :]
    num = jnp.sum(z1 * z2, axis=1, keepdims=True)                      # (B, 1)
    n1 = jnp.sqrt(jnp.sum(z1 * z1, axis=1, keepdims=True))
    n2 = jnp.sqrt(jnp.sum(z2 * z2, axis=1, keepdims=True))
    cos = num / jnp.maximum(n1 * n2, COS_EPS)                          # (B, 1)
    out_ref[...] = jnp.broadcast_to(cos, (B, FP))                      # lane-dense store


# ---- glue: im2col + one-time parameter packing + pallas_call wrapper --------------------
def _im2col(x_nchw):
    # (B, C, H, W) -> (B*H*W, K*K*C), taps ordered (dy, dx) major, channel minor.
    x = jnp.transpose(x_nchw, (0, 2, 3, 1))                            # NHWC
    xp = jnp.pad(x, ((0, 0), (PAD, PAD), (PAD, PAD), (0, 0)))
    taps = [xp[:, dy:dy + H, dx:dx + W, :]
            for dy in range(K) for dx in range(K)]                     # each (B, H, W, C)
    cols = jnp.stack(taps, axis=3)                                     # (B, H, W, K*K, C)
    return cols.reshape(B * HW, KC)


def _padlane(v, n=FP):
    return jnp.pad(v, (0, n - v.shape[0]))


def pack_params(params):
    """One-time packing (hoisted out of the per-call hot path).

    Folds BN (+ fc bias) into per-layer scale/shift, zero-pads weight columns to 128
    lanes, and casts matmul operands to bf16. All padding is exact zeros.
    """
    g1, b1, m1, v1 = params["bn1"]
    g2, b2, m2, v2 = params["bn2"]
    m3, v3 = params["bn3"]
    b3 = params["b3"][0]

    s1 = g1 * lax.rsqrt(v1 + BN_EPS)
    t1 = b1 - m1 * s1
    s2 = g2 * lax.rsqrt(v2 + BN_EPS)
    t2 = b2 - m2 * s2
    s3 = lax.rsqrt(v3 + BN_EPS)                                        # BN3 has no affine
    t3 = (b3 - m3) * s3                                                # fc bias folded in

    rows = [_padlane(r) for r in (s1, t1, s2, t2, s3, t3)]
    rows += [jnp.zeros((FP,), jnp.float32)] * (BN_ROWS - len(rows))
    bnslab = jnp.stack(rows, axis=0)                                   # (8, 128) f32

    wconv = jnp.pad(params["w_conv"],
                    ((0, 0), (0, FP - PREV_DIM))).astype(jnp.bfloat16)  # (36, 128) bf16
    w1 = jnp.pad(params["w1"], ((0, 0), (0, FP - PREV_DIM)))
    w2 = jnp.pad(params["w2"], ((0, 0), (0, FP - PREV_DIM)))
    w3 = jnp.pad(params["w3"], ((0, 0), (0, FP - DIM)))
    wpack = jnp.concatenate([w1, w2, w3], axis=0).astype(jnp.bfloat16)  # (96, 128) bf16

    return {"wconv": wconv, "wpack": wpack, "bnslab": bnslab}


@jax.jit
def simsiam_forward(x1, x2, packed):
    # Both views fused along rows; contraction dim kept at its raw 36 columns (no HBM
    # lane padding) and cast to bf16 — the only x-dependent host-side work per call.
    cols = jnp.concatenate([_im2col(x1), _im2col(x2)], axis=0).astype(jnp.bfloat16)  # (ROWS, 36)

    def full(shape):
        return pl.BlockSpec(shape, lambda i, _n=len(shape): (0,) * _n)

    grid_spec = pltpu.PrefetchScalarGridSpec(
        num_scalar_prefetch=0,
        grid=(1,),
        in_specs=[
            full((ROWS, KC)),                 # fused im2col columns, both views (bf16)
            full((KC, FP)),                   # conv stem weight (bf16, lane-padded cols)
            full((VIEWS + 1, PREV_DIM, FP)[1:]) if False else full((3 * PREV_DIM, FP)),
            full((BN_ROWS, FP)),              # folded BN scale/shift slab (f32)
        ],
        out_specs=full((B, FP)),
    )
    out = pl.pallas_call(
        simsiam_kernel,
        out_shape=jax.ShapeDtypeStruct((B, FP), jnp.float32),
        grid_spec=grid_spec,
        compiler_params=pltpu.CompilerParams(dimension_semantics=("arbitrary",)),
    )(cols, packed["wconv"], packed["wpack"], packed["bnslab"])
    return out[:, 0]                                                   # (B,) like torch CosineSimilarity


# ---- deterministic parameter init (synthetic; no checkpoint load) ----------------------
def init_params(key):
    ks = jax.random.split(key, 8)

    def bn_stats(k, n, affine):
        kk = jax.random.split(k, 4)
        mean = 0.1 * jax.random.normal(kk[0], (n,), jnp.float32)
        var = jax.random.uniform(kk[1], (n,), jnp.float32, minval=0.5, maxval=1.5)
        if affine:
            gamma = jax.random.uniform(kk[2], (n,), jnp.float32, minval=0.8, maxval=1.2)
            beta = 0.1 * jax.random.normal(kk[3], (n,), jnp.float32)
            return jnp.stack([gamma, beta, mean, var], axis=0)
        return jnp.stack([mean, var], axis=0)

    p = {
        "w_conv": (0.2 * jax.random.normal(ks[0], (K, K, CIN, PREV_DIM), jnp.float32)
                   ).reshape(KC, PREV_DIM),
        "w1": 0.2 * jax.random.normal(ks[1], (PREV_DIM, PREV_DIM), jnp.float32),
        "w2": 0.2 * jax.random.normal(ks[2], (PREV_DIM, PREV_DIM), jnp.float32),
        "w3": 0.2 * jax.random.normal(ks[3], (PREV_DIM, DIM), jnp.float32),
        "b3": 0.1 * jax.random.normal(ks[4], (1, DIM), jnp.float32),
        "bn1": bn_stats(ks[5], PREV_DIM, affine=True),
        "bn2": bn_stats(ks[6], PREV_DIM, affine=True),
        "bn3": bn_stats(ks[7], DIM, affine=False),
    }
    return p


# ---- pure-JAX f32 reference (same math, unpadded, no Pallas) ----------------------------
def reference_forward(x1, x2, params):
    def encode(x):
        cols = _im2col(x)                                              # (B*HW, KC)
        h = jnp.maximum(cols @ params["w_conv"], 0.0)
        feats = h.reshape(B, HW, PREV_DIM).mean(axis=1)                # (B, PREV_DIM)
        g1, b1, m1, v1 = params["bn1"]
        h1 = jnp.maximum((feats @ params["w1"] - m1) * lax.rsqrt(v1 + BN_EPS) * g1 + b1, 0.0)
        g2, b2, m2, v2 = params["bn2"]
        h2 = jnp.maximum((h1 @ params["w2"] - m2) * lax.rsqrt(v2 + BN_EPS) * g2 + b2, 0.0)
        z = h2 @ params["w3"] + params["b3"][0]
        m3, v3 = params["bn3"]
        return (z - m3) * lax.rsqrt(v3 + BN_EPS)

    z1, z2 = encode(x1), encode(x2)
    num = jnp.sum(z1 * z2, axis=1)
    den = jnp.maximum(jnp.linalg.norm(z1, axis=1) * jnp.linalg.norm(z2, axis=1), COS_EPS)
    return num / den


if __name__ == "__main__":
    key = jax.random.PRNGKey(0)
    k1, k2, kp = jax.random.split(key, 3)
    x1 = jax.random.normal(k1, (B, CIN, H, W), jnp.float32)
    x2 = jax.random.normal(k2, (B, CIN, H, W), jnp.float32)
    params = init_params(kp)

    # Hoisted, one-time parameter packing (not in the per-call jit).
    packed = pack_params(params)
    jax.block_until_ready(packed)

    dist = simsiam_forward(x1, x2, packed)
    jax.block_until_ready(dist)
    assert dist.shape == (B,)

    # Kernel uses bf16 matmul operands with f32 accumulation -> slightly looser tolerance
    # against the f32 reference.
    ref = reference_forward(x1, x2, params)
    np.testing.assert_allclose(np.asarray(dist), np.asarray(ref), rtol=3e-2, atol=3e-2)
    print("KERNEL_OK")
</pallas_src>

<mosaic_0001>
module attributes {stable_mosaic.version = 11 : i64} {
  func.func @simsiam_kernel(%arg0: i32, %arg1: memref<1024x36xbf16, #tpu.memory_space<vmem>>, %arg2: memref<36x128xbf16, #tpu.memory_space<vmem>>, %arg3: memref<96x128xbf16, #tpu.memory_space<vmem>>, %arg4: memref<8x128xf32, #tpu.memory_space<vmem>>, %arg5: memref<2x128xf32, #tpu.memory_space<vmem>>) attributes {dimension_semantics = [#tpu.dimension_semantics<arbitrary>], iteration_bounds = array<i64: 1>, scalar_prefetch = 0 : i64, scratch_operands = 0 : i64, tpu.core_type = #tpu.core_type<tc>, window_params = [{pipeline_mode = #tpu.pipeline_mode<synchronous>, transform_indices = @transform_0, window_bounds = array<i64: 1024, 36>}, {pipeline_mode = #tpu.pipeline_mode<synchronous>, transform_indices = @transform_1, window_bounds = array<i64: 36, 128>}, {pipeline_mode = #tpu.pipeline_mode<synchronous>, transform_indices = @transform_2, window_bounds = array<i64: 96, 128>}, {pipeline_mode = #tpu.pipeline_mode<synchronous>, transform_indices = @transform_3, window_bounds = array<i64: 8, 128>}, {pipeline_mode = #tpu.pipeline_mode<synchronous>, transform_indices = @transform_4, window_bounds = array<i64: 2, 128>}]} {
    %c0 = arith.constant 0 : index
    %c0_0 = arith.constant 0 : index
    %0 = vector.load %arg1[%c0, %c0_0] : memref<1024x36xbf16, #tpu.memory_space<vmem>>, vector<1024x36xbf16>
    %c0_1 = arith.constant 0 : index
    %c0_2 = arith.constant 0 : index
    %1 = vector.load %arg2[%c0_1, %c0_2] : memref<36x128xbf16, #tpu.memory_space<vmem>>, vector<36x128xbf16>
    %cst = arith.constant dense<0.000000e+00> : vector<1024x128xf32>
    %2 = tpu.matmul %0, %1, %cst {dimension_numbers = #tpu.dot_dimension_numbers<[1], [0], [0], [1], [0, 0, 1, 1], [], []>} : vector<1024x36xbf16>, vector<36x128xbf16>, vector<1024x128xf32> -> vector<1024x128xf32>
    %cst_3 = arith.constant 0.000000e+00 : f32
    %3 = vector.broadcast %cst_3 : f32 to vector<1024x128xf32>
    %4 = arith.maximumf %2, %3 : vector<1024x128xf32>
    %5 = vector.shape_cast %4 : vector<1024x128xf32> to vector<4x256x128xf32>
    %cst_4 = arith.constant dense<0.000000e+00> : vector<4x128xf32>
    %6 = vector.multi_reduction <add>, %5, %cst_4 [1] : vector<4x256x128xf32> to vector<4x128xf32>
    %cst_5 = arith.constant 3.906250e-03 : f32
    %7 = vector.broadcast %cst_5 : f32 to vector<4x128xf32>
    %8 = arith.mulf %6, %7 : vector<4x128xf32>
    %c0_6 = arith.constant 0 : index
    %c0_7 = arith.constant 0 : index
    %9 = vector.load %arg4[%c0_6, %c0_7] : memref<8x128xf32, #tpu.memory_space<vmem>>, vector<8x128xf32>
    %10 = vector.extract_strided_slice %8 {offsets = [0, 0], sizes = [4, 32], strides = [1, 1]} : vector<4x128xf32> to vector<4x32xf32>
    %11 = arith.truncf %10 : vector<4x32xf32> to vector<4x32xbf16>
    %c0_8 = arith.constant 0 : index
    %c0_9 = arith.constant 0 : index
    %12 = vector.load %arg3[%c0_8, %c0_9] : memref<96x128xbf16, #tpu.memory_space<vmem>>, vector<32x128xbf16>
    %cst_10 = arith.constant dense<0.000000e+00> : vector<4x128xf32>
    %13 = tpu.matmul %11, %12, %cst_10 {dimension_numbers = #tpu.dot_dimension_numbers<[1], [0], [0], [1], [0, 0, 1, 1], [], []>} : vector<4x32xbf16>, vector<32x128xbf16>, vector<4x128xf32> -> vector<4x128xf32>
    %14 = vector.extract_strided_slice %9 {offsets = [0, 0], sizes = [1, 128], strides = [1, 1]} : vector<8x128xf32> to vector<1x128xf32>
    %15 = vector.broadcast %14 : vector<1x128xf32> to vector<4x128xf32>
    %16 = arith.mulf %13, %15 : vector<4x128xf32>
    %17 = vector.extract_strided_slice %9 {offsets = [1, 0], sizes = [1, 128], strides = [1, 1]} : vector<8x128xf32> to vector<1x128xf32>
    %18 = vector.broadcast %17 : vector<1x128xf32> to vector<4x128xf32>
    %19 = arith.addf %16, %18 : vector<4x128xf32>
    %cst_11 = arith.constant 0.000000e+00 : f32
    %20 = vector.broadcast %cst_11 : f32 to vector<4x128xf32>
    %21 = arith.maximumf %19, %20 : vector<4x128xf32>
    %22 = vector.extract_strided_slice %21 {offsets = [0, 0], sizes = [4, 32], strides = [1, 1]} : vector<4x128xf32> to vector<4x32xf32>
    %23 = arith.truncf %22 : vector<4x32xf32> to vector<4x32xbf16>
    %c32 = arith.constant 32 : index
    %c0_12 = arith.constant 0 : index
    %24 = vector.load %arg3[%c32, %c0_12] : memref<96x128xbf16, #tpu.memory_space<vmem>>, vector<32x128xbf16>
    %cst_13 = arith.constant dense<0.000000e+00> : vector<4x128xf32>
    %25 = tpu.matmul %23, %24, %cst_13 {dimension_numbers = #tpu.dot_dimension_numbers<[1], [0], [0], [1], [0, 0, 1, 1], [], []>} : vector<4x32xbf16>, vector<32x128xbf16>, vector<4x128xf32> -> vector<4x128xf32>
    %26 = vector.extract_strided_slice %9 {offsets = [2, 0], sizes = [1, 128], strides = [1, 1]} : vector<8x128xf32> to vector<1x128xf32>
    %27 = vector.broadcast %26 : vector<1x128xf32> to vector<4x128xf32>
    %28 = arith.mulf %25, %27 : vector<4x128xf32>
    %29 = vector.extract_strided_slice %9 {offsets = [3, 0], sizes = [1, 128], strides = [1, 1]} : vector<8x128xf32> to vector<1x128xf32>
    %30 = vector.broadcast %29 : vector<1x128xf32> to vector<4x128xf32>
    %31 = arith.addf %28, %30 : vector<4x128xf32>
    %cst_14 = arith.constant 0.000000e+00 : f32
    %32 = vector.broadcast %cst_14 : f32 to vector<4x128xf32>
    %33 = arith.maximumf %31, %32 : vector<4x128xf32>
    %34 = vector.extract_strided_slice %33 {offsets = [0, 0], sizes = [4, 32], strides = [1, 1]} : vector<4x128xf32> to vector<4x32xf32>
    %35 = arith.truncf %34 : vector<4x32xf32> to vector<4x32xbf16>
    %c64 = arith.constant 64 : index
    %c0_15 = arith.constant 0 : index
    %36 = vector.load %arg3[%c64, %c0_15] : memref<96x128xbf16, #tpu.memory_space<vmem>>, vector<32x128xbf16>
    %cst_16 = arith.constant dense<0.000000e+00> : vector<4x128xf32>
    %37 = tpu.matmul %35, %36, %cst_16 {dimension_numbers = #tpu.dot_dimension_numbers<[1], [0], [0], [1], [0, 0, 1, 1], [], []>} : vector<4x32xbf16>, vector<32x128xbf16>, vector<4x128xf32> -> vector<4x128xf32>
    %38 = vector.extract_strided_slice %9 {offsets = [4, 0], sizes = [1, 128], strides = [1, 1]} : vector<8x128xf32> to vector<1x128xf32>
    %39 = vector.broadcast %38 : vector<1x128xf32> to vector<4x128xf32>
    %40 = arith.mulf %37, %39 : vector<4x128xf32>
    %41 = vector.extract_strided_slice %9 {offsets = [5, 0], sizes = [1, 128], strides = [1, 1]} : vector<8x128xf32> to vector<1x128xf32>
    %42 = vector.broadcast %41 : vector<1x128xf32> to vector<4x128xf32>
    %43 = arith.addf %40, %42 : vector<4x128xf32>
    %44 = vector.extract_strided_slice %43 {offsets = [0, 0], sizes = [2, 128], strides = [1, 1]} : vector<4x128xf32> to vector<2x128xf32>
    %45 = vector.extract_strided_slice %43 {offsets = [2, 0], sizes = [2, 128], strides = [1, 1]} : vector<4x128xf32> to vector<2x128xf32>
    %46 = arith.mulf %44, %45 : vector<2x128xf32>
    %cst_17 = arith.constant dense<0.000000e+00> : vector<2xf32>
    %47 = vector.multi_reduction <add>, %46, %cst_17 [1] : vector<2x128xf32> to vector<2xf32>
    %48 = vector.shape_cast %47 : vector<2xf32> to vector<2x1xf32>
    %49 = arith.mulf %44, %44 : vector<2x128xf32>
    %cst_18 = arith.constant dense<0.000000e+00> : vector<2xf32>
    %50 = vector.multi_reduction <add>, %49, %cst_18 [1] : vector<2x128xf32> to vector<2xf32>
    %51 = vector.shape_cast %50 : vector<2xf32> to vector<2x1xf32>
    %52 = math.sqrt %51 : vector<2x1xf32>
    %53 = arith.mulf %45, %45 : vector<2x128xf32>
    %cst_19 = arith.constant dense<0.000000e+00> : vector<2xf32>
    %54 = vector.multi_reduction <add>, %53, %cst_19 [1] : vector<2x128xf32> to vector<2xf32>
    %55 = vector.shape_cast %54 : vector<2xf32> to vector<2x1xf32>
    %56 = math.sqrt %55 : vector<2x1xf32>
    %57 = arith.mulf %52, %56 : vector<2x1xf32>
    %cst_20 = arith.constant 9.99999993E-9 : f32
    %58 = vector.broadcast %cst_20 : f32 to vector<2x1xf32>
    %59 = arith.maximumf %57, %58 : vector<2x1xf32>
    %60 = arith.divf %48, %59 : vector<2x1xf32>
    %61 = vector.shape_cast %60 : vector<2x1xf32> to vector<2x1xf32>
    %62 = vector.broadcast %61 : vector<2x1xf32> to vector<2x128xf32>
    %c0_21 = arith.constant 0 : index
    %c0_22 = arith.constant 0 : index
    %63 = vector.load %arg5[%c0_21, %c0_22] : memref<2x128xf32, #tpu.memory_space<vmem>>, vector<2x128xf32>
    tpu.vector_store %arg5[%c0_21, %c0_22], %62 {strides = array<i32>} : memref<2x128xf32, #tpu.memory_space<vmem>>, vector<2x128xf32>,
    return
  }
  func.func @transform_0(%arg0: i32) -> (i32, i32) {
    %c0_i32 = arith.constant 0 : i32
    %c0_i32_0 = arith.constant 0 : i32
    %c0_i32_1 = arith.constant 0 : i32
    return %c0_i32, %c0_i32_0 : i32, i32
  }
  func.func @transform_1(%arg0: i32) -> (i32, i32) {
    %c0_i32 = arith.constant 0 : i32
    %c0_i32_0 = arith.constant 0 : i32
    %c0_i32_1 = arith.constant 0 : i32
    return %c0_i32, %c0_i32_0 : i32, i32
  }
  func.func @transform_2(%arg0: i32) -> (i32, i32) {
    %c0_i32 = arith.constant 0 : i32
    %c0_i32_0 = arith.constant 0 : i32
    %c0_i32_1 = arith.constant 0 : i32
    return %c0_i32, %c0_i32_0 : i32, i32
  }
  func.func @transform_3(%arg0: i32) -> (i32, i32) {
    %c0_i32 = arith.constant 0 : i32
    %c0_i32_0 = arith.constant 0 : i32
    %c0_i32_1 = arith.constant 0 : i32
    return %c0_i32, %c0_i32_0 : i32, i32
  }
  func.func @transform_4(%arg0: i32) -> (i32, i32) {
    %c0_i32 = arith.constant 0 : i32
    %c0_i32_0 = arith.constant 0 : i32
    %c0_i32_1 = arith.constant 0 : i32
    return %c0_i32, %c0_i32_0 : i32, i32
  }
}

</mosaic_0001>

<llo_original>
// kernel: simsiam_forward.1
$region0: #{simsiam_forward.1}
  #allocation0 [shape = 'u32[]', space=smem, size = 0x4, offset = 0x4, fixed_abs, tag = 'smem constant byte address 0x4 - core index']
  #allocation1 [shape = 'u32[72,128]{1,0:T(1,128)}', space=vmem, size = 0x9000, scoped, tag = 'internal scratch']
  %s0 = inlined_call_operand.vmem [shape: bf16[1024,36], index: 0, kind: input, shape index: {}]
  %s1 = inlined_call_operand.vmem [shape: bf16[36,128], index: 1, kind: input, shape index: {}]
  %s2 = inlined_call_operand.vmem [shape: bf16[96,128], index: 2, kind: input, shape index: {}]
  %s3 = inlined_call_operand.vmem [shape: f32[8,128], index: 3, kind: input, shape index: {}]
  %s4 = inlined_call_operand.vmem [shape: f32[2,128], index: 4, kind: output, shape index: {}]
  %s5 = sld [smem:[#allocation0]]
  $region26: #{simsiam_forward.1} parent=0
    _
  %s7 = ssub.s32 1, %s5
  %s8 = scalar_select 0, %s7, %s5
  // Predicated region
  $region2: #{simsiam_forward.1} parent=0 // pred_check
    _
  $region3: #{simsiam_forward.1} parent=0 // pred_check_branch
    %10 = sbr.rel (0) target = $region5
  $region4: #{simsiam_forward.1} parent=0 // pred_region
    _
  $region5: #{simsiam_forward.1} parent=0 // pred_fallthru
    _
  // Predicated region
  $region6: #{simsiam_forward.1} parent=0 // pred_check
    _
  $region7: #{simsiam_forward.1} parent=0 // pred_check_branch
    %12 = sbr.rel (0) target = $region9
  $region8: #{simsiam_forward.1} parent=0 // pred_region
    _
  $region9: #{simsiam_forward.1} parent=0 // pred_fallthru
    _
  // Predicated region
  $region10: #{simsiam_forward.1} parent=0 // pred_check
    _
  $region11: #{simsiam_forward.1} parent=0 // pred_check_branch
    %14 = sbr.rel (0) target = $region13
  $region12: #{simsiam_forward.1} parent=0 // pred_region
    _
  $region13: #{simsiam_forward.1} parent=0 // pred_fallthru
    _
  // Predicated region
  $region14: #{simsiam_forward.1} parent=0 // pred_check
    _
  $region15: #{simsiam_forward.1} parent=0 // pred_check_branch
    %16 = sbr.rel (0) target = $region17
  $region16: #{simsiam_forward.1} parent=0 // pred_region
    _
  $region17: #{simsiam_forward.1} parent=0 // pred_fallthru
    _
  %v18 = vld [vmem:[%s0] sm:$0xf]
  %v19 = vld [vmem:[%s0 + $0x4] sm:$0xf]
  %v20 = vld [vmem:[%s0 + $0x8] sm:$0xf]
  %v21 = vld [vmem:[%s0 + $0xc] sm:$0xf]
  %v22 = vld [vmem:[%s0 + $0x10] sm:$0xf]
  %v23 = vld [vmem:[%s0 + $0x14] sm:$0xf]
  %v24 = vld [vmem:[%s0 + $0x18] sm:$0xf]
  %v25 = vld [vmem:[%s0 + $0x1c] sm:$0xf]
  %v26 = vld [vmem:[%s0 + $0x20] sm:$0xf]
  %v27 = vld [vmem:[%s0 + $0x24] sm:$0xf]
  %v28 = vld [vmem:[%s0 + $0x28] sm:$0xf]
  %v29 = vld [vmem:[%s0 + $0x2c] sm:$0xf]
  %v30 = vld [vmem:[%s0 + $0x30] sm:$0xf]
  %v31 = vld [vmem:[%s0 + $0x34] sm:$0xf]
  %v32 = vld [vmem:[%s0 + $0x38] sm:$0xf]
  %v33 = vld [vmem:[%s0 + $0x3c] sm:$0xf]
  %v34 = vld [vmem:[%s0 + $0x40] sm:$0xf]
  %v35 = vld [vmem:[%s0 + $0x44] sm:$0xf]
  %v36 = vld [vmem:[%s0 + $0x48] sm:$0xf]
  %v37 = vld [vmem:[%s0 + $0x4c] sm:$0xf]
  %v38 = vld [vmem:[%s0 + $0x50] sm:$0xf]
  %v39 = vld [vmem:[%s0 + $0x54] sm:$0xf]
  %v40 = vld [vmem:[%s0 + $0x58] sm:$0xf]
  %v41 = vld [vmem:[%s0 + $0x5c] sm:$0xf]
  %v42 = vld [vmem:[%s0 + $0x60] sm:$0xf]
  %v43 = vld [vmem:[%s0 + $0x64] sm:$0xf]
  %v44 = vld [vmem:[%s0 + $0x68] sm:$0xf]
  %v45 = vld [vmem:[%s0 + $0x6c] sm:$0xf]
  %v46 = vld [vmem:[%s0 + $0x70] sm:$0xf]
  %v47 = vld [vmem:[%s0 + $0x74] sm:$0xf]
  %v48 = vld [vmem:[%s0 + $0x78] sm:$0xf]
  %v49 = vld [vmem:[%s0 + $0x7c] sm:$0xf]
  %v50 = vld [vmem:[%s0 + $0x80] sm:$0xf]
  %v51 = vld [vmem:[%s0 + $0x84] sm:$0xf]
  %v52 = vld [vmem:[%s0 + $0x88] sm:$0xf]
  %v53 = vld [vmem:[%s0 + $0x8c] sm:$0xf]
  %v54 = vld [vmem:[%s0 + $0x90] sm:$0xf]
  %v55 = vld [vmem:[%s0 + $0x94] sm:$0xf]
  %v56 = vld [vmem:[%s0 + $0x98] sm:$0xf]
  %v57 = vld [vmem:[%s0 + $0x9c] sm:$0xf]
  %v58 = vld [vmem:[%s0 + $0xa0] sm:$0xf]
  %v59 = vld [vmem:[%s0 + $0xa4] sm:$0xf]
  %v60 = vld [vmem:[%s0 + $0xa8] sm:$0xf]
  %v61 = vld [vmem:[%s0 + $0xac] sm:$0xf]
  %v62 = vld [vmem:[%s0 + $0xb0] sm:$0xf]
  %v63 = vld [vmem:[%s0 + $0xb4] sm:$0xf]
  %v64 = vld [vmem:[%s0 + $0xb8] sm:$0xf]
  %v65 = vld [vmem:[%s0 + $0xbc] sm:$0xf]
  %v66 = vld [vmem:[%s0 + $0xc0] sm:$0xf]
  %v67 = vld [vmem:[%s0 + $0xc4] sm:$0xf]
  %v68 = vld [vmem:[%s0 + $0xc8] sm:$0xf]
  %v69 = vld [vmem:[%s0 + $0xcc] sm:$0xf]
  %v70 = vld [vmem:[%s0 + $0xd0] sm:$0xf]
  %v71 = vld [vmem:[%s0 + $0xd4] sm:$0xf]
  %v72 = vld [vmem:[%s0 + $0xd8] sm:$0xf]
  %v73 = vld [vmem:[%s0 + $0xdc] sm:$0xf]
  %v74 = vld [vmem:[%s0 + $0xe0] sm:$0xf]
  %v75 = vld [vmem:[%s0 + $0xe4] sm:$0xf]
  %v76 = vld [vmem:[%s0 + $0xe8] sm:$0xf]
  %v77 = vld [vmem:[%s0 + $0xec] sm:$0xf]
  %v78 = vld [vmem:[%s0 + $0xf0] sm:$0xf]
  %v79 = vld [vmem:[%s0 + $0xf4] sm:$0xf]
  %v80 = vld [vmem:[%s0 + $0xf8] sm:$0xf]
  %v81 = vld [vmem:[%s0 + $0xfc] sm:$0xf]
  %v82 = vld [vmem:[%s0 + $0x100] sm:$0xf]
  %v83 = vld [vmem:[%s0 + $0x104] sm:$0xf]
  %v84 = vld [vmem:[%s0 + $0x108] sm:$0xf]
  %v85 = vld [vmem:[%s0 + $0x10c] sm:$0xf]
  %v86 = vld [vmem:[%s0 + $0x110] sm:$0xf]
  %v87 = vld [vmem:[%s0 + $0x114] sm:$0xf]
  %v88 = vld [vmem:[%s0 + $0x118] sm:$0xf]
  %v89 = vld [vmem:[%s0 + $0x11c] sm:$0xf]
  %v90 = vld [vmem:[%s0 + $0x120] sm:$0xf]
  %v91 = vld [vmem:[%s0 + $0x124] sm:$0xf]
  %v92 = vld [vmem:[%s0 + $0x128] sm:$0xf]
  %v93 = vld [vmem:[%s0 + $0x12c] sm:$0xf]
  %v94 = vld [vmem:[%s0 + $0x130] sm:$0xf]
  %v95 = vld [vmem:[%s0 + $0x134] sm:$0xf]
  %v96 = vld [vmem:[%s0 + $0x138] sm:$0xf]
  %v97 = vld [vmem:[%s0 + $0x13c] sm:$0xf]
  %v98 = vld [vmem:[%s0 + $0x140] sm:$0xf]
  %v99 = vld [vmem:[%s0 + $0x144] sm:$0xf]
  %v100 = vld [vmem:[%s0 + $0x148] sm:$0xf]
  %v101 = vld [vmem:[%s0 + $0x14c] sm:$0xf]
  %v102 = vld [vmem:[%s0 + $0x150] sm:$0xf]
  %v103 = vld [vmem:[%s0 + $0x154] sm:$0xf]
  %v104 = vld [vmem:[%s0 + $0x158] sm:$0xf]
  %v105 = vld [vmem:[%s0 + $0x15c] sm:$0xf]
  %v106 = vld [vmem:[%s0 + $0x160] sm:$0xf]
  %v107 = vld [vmem:[%s0 + $0x164] sm:$0xf]
  %v108 = vld [vmem:[%s0 + $0x168] sm:$0xf]
  %v109 = vld [vmem:[%s0 + $0x16c] sm:$0xf]
  %v110 = vld [vmem:[%s0 + $0x170] sm:$0xf]
  %v111 = vld [vmem:[%s0 + $0x174] sm:$0xf]
  %v112 = vld [vmem:[%s0 + $0x178] sm:$0xf]
  %v113 = vld [vmem:[%s0 + $0x17c] sm:$0xf]
  %v114 = vld [vmem:[%s0 + $0x180] sm:$0xf]
  %v115 = vld [vmem:[%s0 + $0x184] sm:$0xf]
  %v116 = vld [vmem:[%s0 + $0x188] sm:$0xf]
  %v117 = vld [vmem:[%s0 + $0x18c] sm:$0xf]
  %v118 = vld [vmem:[%s0 + $0x190] sm:$0xf]
  %v119 = vld [vmem:[%s0 + $0x194] sm:$0xf]
  %v120 = vld [vmem:[%s0 + $0x198] sm:$0xf]
  %v121 = vld [vmem:[%s0 + $0x19c] sm:$0xf]
  %v122 = vld [vmem:[%s0 + $0x1a0] sm:$0xf]
  %v123 = vld [vmem:[%s0 + $0x1a4] sm:$0xf]
  %v124 = vld [vmem:[%s0 + $0x1a8] sm:$0xf]
  %v125 = vld [vmem:[%s0 + $0x1ac] sm:$0xf]
  %v126 = vld [vmem:[%s0 + $0x1b0] sm:$0xf]
  %v127 = vld [vmem:[%s0 + $0x1b4] sm:$0xf]
  %v128 = vld [vmem:[%s0 + $0x1b8] sm:$0xf]
  %v129 = vld [vmem:[%s0 + $0x1bc] sm:$0xf]
  %v130 = vld [vmem:[%s0 + $0x1c0] sm:$0xf]
  %v131 = vld [vmem:[%s0 + $0x1c4] sm:$0xf]
  %v132 = vld [vmem:[%s0 + $0x1c8] sm:$0xf]
  %v133 = vld [vmem:[%s0 + $0x1cc] sm:$0xf]
  %v134 = vld [vmem:[%s0 + $0x1d0] sm:$0xf]
  %v135 = vld [vmem:[%s0 + $0x1d4] sm:$0xf]
  %v136 = vld [vmem:[%s0 + $0x1d8] sm:$0xf]
  %v137 = vld [vmem:[%s0 + $0x1dc] sm:$0xf]
  %v138 = vld [vmem:[%s0 + $0x1e0] sm:$0xf]
  %v139 = vld [vmem:[%s0 + $0x1e4] sm:$0xf]
  %v140 = vld [vmem:[%s0 + $0x1e8] sm:$0xf]
  %v141 = vld [vmem:[%s0 + $0x1ec] sm:$0xf]
  %v142 = vld [vmem:[%s0 + $0x1f0] sm:$0xf]
  %v143 = vld [vmem:[%s0 + $0x1f4] sm:$0xf]
  %v144 = vld [vmem:[%s0 + $0x1f8] sm:$0xf]
  %v145 = vld [vmem:[%s0 + $0x1fc] sm:$0xf]
  %v146 = vld [vmem:[%s1] sm:$0xf]
  %v147 = vld [vmem:[%s1 + $0x4] sm:$0xf]
  %v148 = vld [vmem:[%s1 + $0x8] sm:$0xf]
  %v149 = vld [vmem:[%s1 + $0xc] sm:$0xf]
  %v150 = vld [vmem:[%s1 + $0x10] sm:$0x3]
  %v279 = vunpack.c.l.b16 %v18
  %v280 = vunpack.c.l.b16 %v19
  %v281 = vunpack.c.l.b16 %v20
  %v282 = vunpack.c.l.b16 %v21
  %v283 = vunpack.c.l.b16 %v22
  %v284 = vunpack.c.l.b16 %v23
  %v285 = vunpack.c.l.b16 %v24
  %v286 = vunpack.c.l.b16 %v25
  %v287 = vunpack.c.l.b16 %v26
  %v288 = vunpack.c.l.b16 %v27
  %v289 = vunpack.c.l.b16 %v28
  %v290 = vunpack.c.l.b16 %v29
  %v291 = vunpack.c.l.b16 %v30
  %v292 = vunpack.c.l.b16 %v31
  %v293 = vunpack.c.l.b16 %v32
  %v294 = vunpack.c.l.b16 %v33
  %v295 = vunpack.c.l.b16 %v34
  %v296 = vunpack.c.l.b16 %v35
  %v297 = vunpack.c.l.b16 %v36
  %v298 = vunpack.c.l.b16 %v37
  %v299 = vunpack.c.l.b16 %v38
  %v300 = vunpack.c.l.b16 %v39
  %v301 = vunpack.c.l.b16 %v40
  %v302 = vunpack.c.l.b16 %v41
  %v303 = vunpack.c.l.b16 %v42
  %v304 = vunpack.c.l.b16 %v43
  %v305 = vunpack.c.l.b16 %v44
  %v306 = vunpack.c.l.b16 %v45
  %v307 = vunpack.c.l.b16 %v46
  %v308 = vunpack.c.l.b16 %v47
  %v309 = vunpack.c.l.b16 %v48
  %v310 = vunpack.c.l.b16 %v49
  %v311 = vunpack.c.l.b16 %v50
  %v312 = vunpack.c.l.b16 %v51
  %v313 = vunpack.c.l.b16 %v52
  %v314 = vunpack.c.l.b16 %v53
  %v315 = vunpack.c.l.b16 %v54
  %v316 = vunpack.c.l.b16 %v55
  %v317 = vunpack.c.l.b16 %v56
  %v318 = vunpack.c.l.b16 %v57
  %v319 = vunpack.c.l.b16 %v58
  %v320 = vunpack.c.l.b16 %v59
  %v321 = vunpack.c.l.b16 %v60
  %v322 = vunpack.c.l.b16 %v61
  %v323 = vunpack.c.l.b16 %v62
  %v324 = vunpack.c.l.b16 %v63
  %v325 = vunpack.c.l.b16 %v64
  %v326 = vunpack.c.l.b16 %v65
  %v327 = vunpack.c.l.b16 %v66
  %v328 = vunpack.c.l.b16 %v67
  %v329 = vunpack.c.l.b16 %v68
  %v330 = vunpack.c.l.b16 %v69
  %v331 = vunpack.c.l.b16 %v70
  %v332 = vunpack.c.l.b16 %v71
  %v333 = vunpack.c.l.b16 %v72
  %v334 = vunpack.c.l.b16 %v73
  %v335 = vunpack.c.l.b16 %v74
  %v336 = vunpack.c.l.b16 %v75
  %v337 = vunpack.c.l.b16 %v76
  %v338 = vunpack.c.l.b16 %v77
  %v339 = vunpack.c.l.b16 %v78
  %v340 = vunpack.c.l.b16 %v79
  %v341 = vunpack.c.l.b16 %v80
  %v342 = vunpack.c.l.b16 %v81
  %v343 = vunpack.c.l.b16 %v82
  %v344 = vunpack.c.l.b16 %v83
  %v345 = vunpack.c.l.b16 %v84
  %v346 = vunpack.c.l.b16 %v85
  %v347 = vunpack.c.l.b16 %v86
  %v348 = vunpack.c.l.b16 %v87
  %v349 = vunpack.c.l.b16 %v88
  %v350 = vunpack.c.l.b16 %v89
  %v351 = vunpack.c.l.b16 %v90
  %v352 = vunpack.c.l.b16 %v91
  %v353 = vunpack.c.l.b16 %v92
  %v354 = vunpack.c.l.b16 %v93
  %v355 = vunpack.c.l.b16 %v94
  %v356 = vunpack.c.l.b16 %v95
  %v357 = vunpack.c.l.b16 %v96
  %v358 = vunpack.c.l.b16 %v97
  %v359 = vunpack.c.l.b16 %v98
  %v360 = vunpack.c.l.b16 %v99
  %v361 = vunpack.c.l.b16 %v100
  %v362 = vunpack.c.l.b16 %v101
  %v363 = vunpack.c.l.b16 %v102
  %v364 = vunpack.c.l.b16 %v103
  %v365 = vunpack.c.l.b16 %v104
  %v366 = vunpack.c.l.b16 %v105
  %v367 = vunpack.c.l.b16 %v106
  %v368 = vunpack.c.l.b16 %v107
  %v369 = vunpack.c.l.b16 %v108
  %v370 = vunpack.c.l.b16 %v109
  %v371 = vunpack.c.l.b16 %v110
  %v372 = vunpack.c.l.b16 %v111
  %v373 = vunpack.c.l.b16 %v112
  %v374 = vunpack.c.l.b16 %v113
  %v375 = vunpack.c.l.b16 %v114
  %v376 = vunpack.c.l.b16 %v115
  %v377 = vunpack.c.l.b16 %v116
  %v378 = vunpack.c.l.b16 %v117
  %v379 = vunpack.c.l.b16 %v118
  %v380 = vunpack.c.l.b16 %v119
  %v381 = vunpack.c.l.b16 %v120
  %v382 = vunpack.c.l.b16 %v121
  %v383 = vunpack.c.l.b16 %v122
  %v384 = vunpack.c.l.b16 %v123
  %v385 = vunpack.c.l.b16 %v124
  %v386 = vunpack.c.l.b16 %v125
  %v387 = vunpack.c.l.b16 %v126
  %v388 = vunpack.c.l.b16 %v127
  %v389 = vunpack.c.l.b16 %v128
  %v390 = vunpack.c.l.b16 %v129
  %v391 = vunpack.c.l.b16 %v130
  %v392 = vunpack.c.l.b16 %v131
  %v393 = vunpack.c.l.b16 %v132
  %v394 = vunpack.c.l.b16 %v133
  %v395 = vunpack.c.l.b16 %v134
  %v396 = vunpack.c.l.b16 %v135
  %v397 = vunpack.c.l.b16 %v136
  %v398 = vunpack.c.l.b16 %v137
  %v399 = vunpack.c.l.b16 %v138
  %v400 = vunpack.c.l.b16 %v139
  %v401 = vunpack.c.l.b16 %v140
  %v402 = vunpack.c.l.b16 %v141
  %v403 = vunpack.c.l.b16 %v142
  %v404 = vunpack.c.l.b16 %v143
  %v405 = vunpack.c.l.b16 %v144
  %v406 = vunpack.c.l.b16 %v145
  %v407 = vpack.c.b16 %v280, %v279
  %v408 = vpack.c.b16 %v282, %v281
  %v409 = vpack.c.b16 %v284, %v283
  %v410 = vpack.c.b16 %v286, %v285
  %v411 = vpack.c.b16 %v288, %v287
  %v412 = vpack.c.b16 %v290, %v289
  %v413 = vpack.c.b16 %v292, %v291
  %v414 = vpack.c.b16 %v294, %v293
  %v415 = vpack.c.b16 %v296, %v295
  %v416 = vpack.c.b16 %v298, %v297
  %v417 = vpack.c.b16 %v300, %v299
  %v418 = vpack.c.b16 %v302, %v301
  %v419 = vpack.c.b16 %v304, %v303
  %v420 = vpack.c.b16 %v306, %v305
  %v421 = vpack.c.b16 %v308, %v307
  %v422 = vpack.c.b16 %v310, %v309
  %v423 = vpack.c.b16 %v312, %v311
  %v424 = vpack.c.b16 %v314, %v313
  %v425 = vpack.c.b16 %v316, %v315
  %v426 = vpack.c.b16 %v318, %v317
  %v427 = vpack.c.b16 %v320, %v319
  %v428 = vpack.c.b16 %v322, %v321
  %v429 = vpack.c.b16 %v324, %v323
  %v430 = vpack.c.b16 %v326, %v325
  %v431 = vpack.c.b16 %v328, %v327
  %v432 = vpack.c.b16 %v330, %v329
  %v433 = vpack.c.b16 %v332, %v331
  %v434 = vpack.c.b16 %v334, %v333
  %v435 = vpack.c.b16 %v336, %v335
  %v436 = vpack.c.b16 %v338, %v337
  %v437 = vpack.c.b16 %v340, %v339
  %v438 = vpack.c.b16 %v342, %v341
  %v439 = vpack.c.b16 %v344, %v343
  %v440 = vpack.c.b16 %v346, %v345
  %v441 = vpack.c.b16 %v348, %v347
  %v442 = vpack.c.b16 %v350, %v349
  %v443 = vpack.c.b16 %v352, %v351
  %v444 = vpack.c.b16 %v354, %v353
  %v445 = vpack.c.b16 %v356, %v355
  %v446 = vpack.c.b16 %v358, %v357
  %v447 = vpack.c.b16 %v360, %v359
  %v448 = vpack.c.b16 %v362, %v361
  %v449 = vpack.c.b16 %v364, %v363
  %v450 = vpack.c.b16 %v366, %v365
  %v451 = vpack.c.b16 %v368, %v367
  %v452 = vpack.c.b16 %v370, %v369
  %v453 = vpack.c.b16 %v372, %v371
  %v454 = vpack.c.b16 %v374, %v373
  %v455 = vpack.c.b16 %v376, %v375
  %v456 = vpack.c.b16 %v378, %v377
  %v457 = vpack.c.b16 %v380, %v379
  %v458 = vpack.c.b16 %v382, %v381
  %v459 = vpack.c.b16 %v384, %v383
  %v460 = vpack.c.b16 %v386, %v385
  %v461 = vpack.c.b16 %v388, %v387
  %v462 = vpack.c.b16 %v390, %v389
  %v463 = vpack.c.b16 %v392, %v391
  %v464 = vpack.c.b16 %v394, %v393
  %v465 = vpack.c.b16 %v396, %v395
  %v466 = vpack.c.b16 %v398, %v397
  %v467 = vpack.c.b16 %v400, %v399
  %v468 = vpack.c.b16 %v402, %v401
  %v469 = vpack.c.b16 %v404, %v403
  %v470 = vpack.c.b16 %v406, %v405
  %v476 = vunpack.c.l.b16 %v146
  %v477 = vunpack.c.l.b16 %v147
  %v478 = vunpack.c.l.b16 %v148
  %v479 = vunpack.c.l.b16 %v149
  %v480 = vunpack.c.l.b16 %v150
  %v481 = vpack.c.b16 %v477, %v476
  %v482 = vpack.c.b16 %v479, %v478
  %v483 = vpack.c.b16 %v480, %v480
  %vm486 = vcmask 293888
  %v488 = vsel %vm486, %v407, 0
  %v491 = vsel %vm486, %v408, 0
  %v494 = vsel %vm486, %v409, 0
  %v497 = vsel %vm486, %v410, 0
  %v500 = vsel %vm486, %v411, 0
  %v503 = vsel %vm486, %v412, 0
  %v506 = vsel %vm486, %v413, 0
  %v509 = vsel %vm486, %v414, 0
  %v512 = vsel %vm486, %v415, 0
  %v515 = vsel %vm486, %v416, 0
  %v518 = vsel %vm486, %v417, 0
  %v521 = vsel %vm486, %v418, 0
  %v524 = vsel %vm486, %v419, 0
  %v527 = vsel %vm486, %v420, 0
  %v530 = vsel %vm486, %v421, 0
  %v533 = vsel %vm486, %v422, 0
  %v536 = vsel %vm486, %v423, 0
  %v539 = vsel %vm486, %v424, 0
  %v542 = vsel %vm486, %v425, 0
  %v545 = vsel %vm486, %v426, 0
  %v548 = vsel %vm486, %v427, 0
  %v551 = vsel %vm486, %v428, 0
  %v554 = vsel %vm486, %v429, 0
  %v557 = vsel %vm486, %v430, 0
  %v560 = vsel %vm486, %v431, 0
  %v563 = vsel %vm486, %v432, 0
  %v566 = vsel %vm486, %v433, 0
  %v569 = vsel %vm486, %v434, 0
  %v572 = vsel %vm486, %v435, 0
  %v575 = vsel %vm486, %v436, 0
  %v578 = vsel %vm486, %v437, 0
  %v581 = vsel %vm486, %v438, 0
  %v584 = vsel %vm486, %v439, 0
  %v587 = vsel %vm486, %v440, 0
  %v590 = vsel %vm486, %v441, 0
  %v593 = vsel %vm486, %v442, 0
  %v596 = vsel %vm486, %v443, 0
  %v599 = vsel %vm486, %v444, 0
  %v602 = vsel %vm486, %v445, 0
  %v605 = vsel %vm486, %v446, 0
  %v608 = vsel %vm486, %v447, 0
  %v611 = vsel %vm486, %v448, 0
  %v614 = vsel %vm486, %v449, 0
  %v617 = vsel %vm486, %v450, 0
  %v620 = vsel %vm486, %v451, 0
  %v623 = vsel %vm486, %v452, 0
  %v626 = vsel %vm486, %v453, 0
  %v629 = vsel %vm486, %v454, 0
  %v632 = vsel %vm486, %v455, 0
  %v635 = vsel %vm486, %v456, 0
  %v638 = vsel %vm486, %v457, 0
  %v641 = vsel %vm486, %v458, 0
  %v644 = vsel %vm486, %v459, 0
  %v647 = vsel %vm486, %v460, 0
  %v650 = vsel %vm486, %v461, 0
  %v653 = vsel %vm486, %v462, 0
  %v656 = vsel %vm486, %v463, 0
  %v659 = vsel %vm486, %v464, 0
  %v662 = vsel %vm486, %v465, 0
  %v665 = vsel %vm486, %v466, 0
  %v668 = vsel %vm486, %v467, 0
  %v671 = vsel %vm486, %v468, 0
  %v674 = vsel %vm486, %v469, 0
  %v677 = vsel %vm486, %v470, 0
  %vm679 = vcmask 1041408
  %v681 = vsel %vm679, %v483, 0
  %683 = vmatpush.bf16.msra.mxu0 0
  %684 = vmatpush.bf16.msra.mxu0 0
  %685 = vmatpush.bf16.msra.mxu0 0
  %686 = vmatpush.bf16.msra.mxu0 0
  %687 = vmatpush.bf16.msra.mxu0 0
  %688 = vmatpush.bf16.msra.mxu0 %v681
  %689 = vmatpush.bf16.msra.mxu0 %v482
  %690 = vmatpush.bf16.msra.mxu0 %v481
  %691 = vmatmul.bf16.gmra.mxu0 %v488
  %v692 = vpop.f32.mrf.mxu0
  %v693 = vadd.f32 0.0, %v692
  %v694 = vpop.f32.mrf.mxu0
  %v695 = vadd.f32 0.0, %v694
  %696 = vmatmul.bf16.gmra.mxu0 %v491
  %v697 = vpop.f32.mrf.mxu0
  %v698 = vadd.f32 0.0, %v697
  %v699 = vpop.f32.mrf.mxu0
  %v700 = vadd.f32 0.0, %v699
  %701 = vmatmul.bf16.gmra.mxu0 %v494
  %v702 = vpop.f32.mrf.mxu0
  %v703 = vadd.f32 0.0, %v702
  %v704 = vpop.f32.mrf.mxu0
  %v705 = vadd.f32 0.0, %v704
  %706 = vmatmul.bf16.gmra.mxu0 %v497
  %v707 = vpop.f32.mrf.mxu0
  %v708 = vadd.f32 0.0, %v707
  %v709 = vpop.f32.mrf.mxu0
  %v710 = vadd.f32 0.0, %v709
  %711 = vmatmul.bf16.gmra.mxu0 %v500
  %v712 = vpop.f32.mrf.mxu0
  %v713 = vadd.f32 0.0, %v712
  %v714 = vpop.f32.mrf.mxu0
  %v715 = vadd.f32 0.0, %v714
  %716 = vmatmul.bf16.gmra.mxu0 %v503
  %v717 = vpop.f32.mrf.mxu0
  %v718 = vadd.f32 0.0, %v717
  %v719 = vpop.f32.mrf.mxu0
  %v720 = vadd.f32 0.0, %v719
  %721 = vmatmul.bf16.gmra.mxu0 %v506
  %v722 = vpop.f32.mrf.mxu0
  %v723 = vadd.f32 0.0, %v722
  %v724 = vpop.f32.mrf.mxu0
  %v725 = vadd.f32 0.0, %v724
  %726 = vmatmul.bf16.gmra.mxu0 %v509
  %v727 = vpop.f32.mrf.mxu0
  %v728 = vadd.f32 0.0, %v727
  %v729 = vpop.f32.mrf.mxu0
  %v730 = vadd.f32 0.0, %v729
  %731 = vmatmul.bf16.gmra.mxu0 %v512
  %v732 = vpop.f32.mrf.mxu0
  %v733 = vadd.f32 0.0, %v732
  %v734 = vpop.f32.mrf.mxu0
  %v735 = vadd.f32 0.0, %v734
  %736 = vmatmul.bf16.gmra.mxu0 %v515
  %v737 = vpop.f32.mrf.mxu0
  %v738 = vadd.f32 0.0, %v737
  %v739 = vpop.f32.mrf.mxu0
  %v740 = vadd.f32 0.0, %v739
  %741 = vmatmul.bf16.gmra.mxu0 %v518
  %v742 = vpop.f32.mrf.mxu0
  %v743 = vadd.f32 0.0, %v742
  %v744 = vpop.f32.mrf.mxu0
  %v745 = vadd.f32 0.0, %v744
  %746 = vmatmul.bf16.gmra.mxu0 %v521
  %v747 = vpop.f32.mrf.mxu0
  %v748 = vadd.f32 0.0, %v747
  %v749 = vpop.f32.mrf.mxu0
  %v750 = vadd.f32 0.0, %v749
  %751 = vmatmul.bf16.gmra.mxu0 %v524
  %v752 = vpop.f32.mrf.mxu0
  %v753 = vadd.f32 0.0, %v752
  %v754 = vpop.f32.mrf.mxu0
  %v755 = vadd.f32 0.0, %v754
  %756 = vmatmul.bf16.gmra.mxu0 %v527
  %v757 = vpop.f32.mrf.mxu0
  %v758 = vadd.f32 0.0, %v757
  %v759 = vpop.f32.mrf.mxu0
  %v760 = vadd.f32 0.0, %v759
  %761 = vmatmul.bf16.gmra.mxu0 %v530
  %v762 = vpop.f32.mrf.mxu0
  %v763 = vadd.f32 0.0, %v762
  %v764 = vpop.f32.mrf.mxu0
  %v765 = vadd.f32 0.0, %v764
  %766 = vmatmul.bf16.gmra.mxu0 %v533
  %v767 = vpop.f32.mrf.mxu0
  %v768 = vadd.f32 0.0, %v767
  %v769 = vpop.f32.mrf.mxu0
  %v770 = vadd.f32 0.0, %v769
  %771 = vmatmul.bf16.gmra.mxu0 %v536
  %v772 = vpop.f32.mrf.mxu0
  %v773 = vadd.f32 0.0, %v772
  %v774 = vpop.f32.mrf.mxu0
  %v775 = vadd.f32 0.0, %v774
  %776 = vmatmul.bf16.gmra.mxu0 %v539
  %v777 = vpop.f32.mrf.mxu0
  %v778 = vadd.f32 0.0, %v777
  %v779 = vpop.f32.mrf.mxu0
  %v780 = vadd.f32 0.0, %v779
  %781 = vmatmul.bf16.gmra.mxu0 %v542
  %v782 = vpop.f32.mrf.mxu0
  %v783 = vadd.f32 0.0, %v782
  %v784 = vpop.f32.mrf.mxu0
  %v785 = vadd.f32 0.0, %v784
  %786 = vmatmul.bf16.gmra.mxu0 %v545
  %v787 = vpop.f32.mrf.mxu0
  %v788 = vadd.f32 0.0, %v787
  %v789 = vpop.f32.mrf.mxu0
  %v790 = vadd.f32 0.0, %v789
  %791 = vmatmul.bf16.gmra.mxu0 %v548
  %v792 = vpop.f32.mrf.mxu0
  %v793 = vadd.f32 0.0, %v792
  %v794 = vpop.f32.mrf.mxu0
  %v795 = vadd.f32 0.0, %v794
  %796 = vmatmul.bf16.gmra.mxu0 %v551
  %v797 = vpop.f32.mrf.mxu0
  %v798 = vadd.f32 0.0, %v797
  %v799 = vpop.f32.mrf.mxu0
  %v800 = vadd.f32 0.0, %v799
  %801 = vmatmul.bf16.gmra.mxu0 %v554
  %v802 = vpop.f32.mrf.mxu0
  %v803 = vadd.f32 0.0, %v802
  %v804 = vpop.f32.mrf.mxu0
  %v805 = vadd.f32 0.0, %v804
  %806 = vmatmul.bf16.gmra.mxu0 %v557
  %v807 = vpop.f32.mrf.mxu0
  %v808 = vadd.f32 0.0, %v807
  %v809 = vpop.f32.mrf.mxu0
  %v810 = vadd.f32 0.0, %v809
  %811 = vmatmul.bf16.gmra.mxu0 %v560
  %v812 = vpop.f32.mrf.mxu0
  %v813 = vadd.f32 0.0, %v812
  %v814 = vpop.f32.mrf.mxu0
  %v815 = vadd.f32 0.0, %v814
  %816 = vmatmul.bf16.gmra.mxu0 %v563
  %v817 = vpop.f32.mrf.mxu0
  %v818 = vadd.f32 0.0, %v817
  %v819 = vpop.f32.mrf.mxu0
  %v820 = vadd.f32 0.0, %v819
  %821 = vmatmul.bf16.gmra.mxu0 %v566
  %v822 = vpop.f32.mrf.mxu0
  %v823 = vadd.f32 0.0, %v822
  %v824 = vpop.f32.mrf.mxu0
  %v825 = vadd.f32 0.0, %v824
  %826 = vmatmul.bf16.gmra.mxu0 %v569
  %v827 = vpop.f32.mrf.mxu0
  %v828 = vadd.f32 0.0, %v827
  %v829 = vpop.f32.mrf.mxu0
  %v830 = vadd.f32 0.0, %v829
  %831 = vmatmul.bf16.gmra.mxu0 %v572
  %v832 = vpop.f32.mrf.mxu0
  %v833 = vadd.f32 0.0, %v832
  %v834 = vpop.f32.mrf.mxu0
  %v835 = vadd.f32 0.0, %v834
  %836 = vmatmul.bf16.gmra.mxu0 %v575
  %v837 = vpop.f32.mrf.mxu0
  %v838 = vadd.f32 0.0, %v837
  %v839 = vpop.f32.mrf.mxu0
  %v840 = vadd.f32 0.0, %v839
  %841 = vmatmul.bf16.gmra.mxu0 %v578
  %v842 = vpop.f32.mrf.mxu0
  %v843 = vadd.f32 0.0, %v842
  %v844 = vpop.f32.mrf.mxu0
  %v845 = vadd.f32 0.0, %v844
  %846 = vmatmul.bf16.gmra.mxu0 %v581
  %v847 = vpop.f32.mrf.mxu0
  %v848 = vadd.f32 0.0, %v847
  %v849 = vpop.f32.mrf.mxu0
  %v850 = vadd.f32 0.0, %v849
  %851 = vmatmul.bf16.gmra.mxu0 %v584
  %v852 = vpop.f32.mrf.mxu0
  %v853 = vadd.f32 0.0, %v852
  %v854 = vpop.f32.mrf.mxu0
  %v855 = vadd.f32 0.0, %v854
  %856 = vmatmul.bf16.gmra.mxu0 %v587
  %v857 = vpop.f32.mrf.mxu0
  %v858 = vadd.f32 0.0, %v857
  %v859 = vpop.f32.mrf.mxu0
  %v860 = vadd.f32 0.0, %v859
  %861 = vmatmul.bf16.gmra.mxu0 %v590
  %v862 = vpop.f32.mrf.mxu0
  %v863 = vadd.f32 0.0, %v862
  %v864 = vpop.f32.mrf.mxu0
  %v865 = vadd.f32 0.0, %v864
  %866 = vmatmul.bf16.gmra.mxu0 %v593
  %v867 = vpop.f32.mrf.mxu0
  %v868 = vadd.f32 0.0, %v867
  %v869 = vpop.f32.mrf.mxu0
  %v870 = vadd.f32 0.0, %v869
  %871 = vmatmul.bf16.gmra.mxu0 %v596
  %v872 = vpop.f32.mrf.mxu0
  %v873 = vadd.f32 0.0, %v872
  %v874 = vpop.f32.mrf.mxu0
  %v875 = vadd.f32 0.0, %v874
  %876 = vmatmul.bf16.gmra.mxu0 %v599
  %v877 = vpop.f32.mrf.mxu0
  %v878 = vadd.f32 0.0, %v877
  %v879 = vpop.f32.mrf.mxu0
  %v880 = vadd.f32 0.0, %v879
  %881 = vmatmul.bf16.gmra.mxu0 %v602
  %v882 = vpop.f32.mrf.mxu0
  %v883 = vadd.f32 0.0, %v882
  %v884 = vpop.f32.mrf.mxu0
  %v885 = vadd.f32 0.0, %v884
  %886 = vmatmul.bf16.gmra.mxu0 %v605
  %v887 = vpop.f32.mrf.mxu0
  %v888 = vadd.f32 0.0, %v887
  %v889 = vpop.f32.mrf.mxu0
  %v890 = vadd.f32 0.0, %v889
  %891 = vmatmul.bf16.gmra.mxu0 %v608
  %v892 = vpop.f32.mrf.mxu0
  %v893 = vadd.f32 0.0, %v892
  %v894 = vpop.f32.mrf.mxu0
  %v895 = vadd.f32 0.0, %v894
  %896 = vmatmul.bf16.gmra.mxu0 %v611
  %v897 = vpop.f32.mrf.mxu0
  %v898 = vadd.f32 0.0, %v897
  %v899 = vpop.f32.mrf.mxu0
  %v900 = vadd.f32 0.0, %v899
  %901 = vmatmul.bf16.gmra.mxu0 %v614
  %v902 = vpop.f32.mrf.mxu0
  %v903 = vadd.f32 0.0, %v902
  %v904 = vpop.f32.mrf.mxu0
  %v905 = vadd.f32 0.0, %v904
  %906 = vmatmul.bf16.gmra.mxu0 %v617
  %v907 = vpop.f32.mrf.mxu0
  %v908 = vadd.f32 0.0, %v907
  %v909 = vpop.f32.mrf.mxu0
  %v910 = vadd.f32 0.0, %v909
  %911 = vmatmul.bf16.gmra.mxu0 %v620
  %v912 = vpop.f32.mrf.mxu0
  %v913 = vadd.f32 0.0, %v912
  %v914 = vpop.f32.mrf.mxu0
  %v915 = vadd.f32 0.0, %v914
  %916 = vmatmul.bf16.gmra.mxu0 %v623
  %v917 = vpop.f32.mrf.mxu0
  %v918 = vadd.f32 0.0, %v917
  %v919 = vpop.f32.mrf.mxu0
  %v920 = vadd.f32 0.0, %v919
  %921 = vmatmul.bf16.gmra.mxu0 %v626
  %v922 = vpop.f32.mrf.mxu0
  %v923 = vadd.f32 0.0, %v922
  %v924 = vpop.f32.mrf.mxu0
  %v925 = vadd.f32 0.0, %v924
  %926 = vmatmul.bf16.gmra.mxu0 %v629
  %v927 = vpop.f32.mrf.mxu0
  %v928 = vadd.f32 0.0, %v927
  %v929 = vpop.f32.mrf.mxu0
  %v930 = vadd.f32 0.0, %v929
  %931 = vmatmul.bf16.gmra.mxu0 %v632
  %v932 = vpop.f32.mrf.mxu0
  %v933 = vadd.f32 0.0, %v932
  %v934 = vpop.f32.mrf.mxu0
  %v935 = vadd.f32 0.0, %v934
  %936 = vmatmul.bf16.gmra.mxu0 %v635
  %v937 = vpop.f32.mrf.mxu0
  %v938 = vadd.f32 0.0, %v937
  %v939 = vpop.f32.mrf.mxu0
  %v940 = vadd.f32 0.0, %v939
  %941 = vmatmul.bf16.gmra.mxu0 %v638
  %v942 = vpop.f32.mrf.mxu0
  %v943 = vadd.f32 0.0, %v942
  %v944 = vpop.f32.mrf.mxu0
  %v945 = vadd.f32 0.0, %v944
  %946 = vmatmul.bf16.gmra.mxu0 %v641
  %v947 = vpop.f32.mrf.mxu0
  %v948 = vadd.f32 0.0, %v947
  %v949 = vpop.f32.mrf.mxu0
  %v950 = vadd.f32 0.0, %v949
  %951 = vmatmul.bf16.gmra.mxu0 %v644
  %v952 = vpop.f32.mrf.mxu0
  %v953 = vadd.f32 0.0, %v952
  %v954 = vpop.f32.mrf.mxu0
  %v955 = vadd.f32 0.0, %v954
  %956 = vmatmul.bf16.gmra.mxu0 %v647
  %v957 = vpop.f32.mrf.mxu0
  %v958 = vadd.f32 0.0, %v957
  %v959 = vpop.f32.mrf.mxu0
  %v960 = vadd.f32 0.0, %v959
  %961 = vmatmul.bf16.gmra.mxu0 %v650
  %v962 = vpop.f32.mrf.mxu0
  %v963 = vadd.f32 0.0, %v962
  %v964 = vpop.f32.mrf.mxu0
  %v965 = vadd.f32 0.0, %v964
  %966 = vmatmul.bf16.gmra.mxu0 %v653
  %v967 = vpop.f32.mrf.mxu0
  %v968 = vadd.f32 0.0, %v967
  %v969 = vpop.f32.mrf.mxu0
  %v970 = vadd.f32 0.0, %v969
  %971 = vmatmul.bf16.gmra.mxu0 %v656
  %v972 = vpop.f32.mrf.mxu0
  %v973 = vadd.f32 0.0, %v972
  %v974 = vpop.f32.mrf.mxu0
  %v975 = vadd.f32 0.0, %v974
  %976 = vmatmul.bf16.gmra.mxu0 %v659
  %v977 = vpop.f32.mrf.mxu0
  %v978 = vadd.f32 0.0, %v977
  %v979 = vpop.f32.mrf.mxu0
  %v980 = vadd.f32 0.0, %v979
  %981 = vmatmul.bf16.gmra.mxu0 %v662
  %v982 = vpop.f32.mrf.mxu0
  %v983 = vadd.f32 0.0, %v982
  %v984 = vpop.f32.mrf.mxu0
  %v985 = vadd.f32 0.0, %v984
  %986 = vmatmul.bf16.gmra.mxu0 %v665
  %v987 = vpop.f32.mrf.mxu0
  %v988 = vadd.f32 0.0, %v987
  %v989 = vpop.f32.mrf.mxu0
  %v990 = vadd.f32 0.0, %v989
  %991 = vmatmul.bf16.gmra.mxu0 %v668
  %v992 = vpop.f32.mrf.mxu0
  %v993 = vadd.f32 0.0, %v992
  %v994 = vpop.f32.mrf.mxu0
  %v995 = vadd.f32 0.0, %v994
  %996 = vmatmul.bf16.gmra.mxu0 %v671
  %v997 = vpop.f32.mrf.mxu0
  %v998 = vadd.f32 0.0, %v997
  %v999 = vpop.f32.mrf.mxu0
  %v1000 = vadd.f32 0.0, %v999
  %1001 = vmatmul.bf16.gmra.mxu0 %v674
  %v1002 = vpop.f32.mrf.mxu0
  %v1003 = vadd.f32 0.0, %v1002
  %v1004 = vpop.f32.mrf.mxu0
  %v1005 = vadd.f32 0.0, %v1004
  %1006 = vmatmul.bf16.gmra.mxu0 %v677
  %v1007 = vpop.f32.mrf.mxu0
  %v1008 = vadd.f32 0.0, %v1007
  %v1009 = vpop.f32.mrf.mxu0
  %v1010 = vadd.f32 0.0, %v1009
  %1011 = vdwg.mxu0
  %v1012 = vmax.f32 %v693, 0.0
  %v1013 = vmax.f32 %v695, 0.0
  %v1014 = vmax.f32 %v698, 0.0
  %v1015 = vmax.f32 %v700, 0.0
  %v1016 = vmax.f32 %v703, 0.0
  %v1017 = vmax.f32 %v705, 0.0
  %v1018 = vmax.f32 %v708, 0.0
  %v1019 = vmax.f32 %v710, 0.0
  %v1020 = vmax.f32 %v713, 0.0
  %v1021 = vmax.f32 %v715, 0.0
  %v1022 = vmax.f32 %v718, 0.0
  %v1023 = vmax.f32 %v720, 0.0
  %v1024 = vmax.f32 %v723, 0.0
  %v1025 = vmax.f32 %v725, 0.0
  %v1026 = vmax.f32 %v728, 0.0
  %v1027 = vmax.f32 %v730, 0.0
  %v1028 = vmax.f32 %v733, 0.0
  %v1029 = vmax.f32 %v735, 0.0
  %v1030 = vmax.f32 %v738, 0.0
  %v1031 = vmax.f32 %v740, 0.0
  %v1032 = vmax.f32 %v743, 0.0
  %v1033 = vmax.f32 %v745, 0.0
  %v1034 = vmax.f32 %v748, 0.0
  %v1035 = vmax.f32 %v750, 0.0
  %v1036 = vmax.f32 %v753, 0.0
  %v1037 = vmax.f32 %v755, 0.0
  %v1038 = vmax.f32 %v758, 0.0
  %v1039 = vmax.f32 %v760, 0.0
  %v1040 = vmax.f32 %v763, 0.0
  %v1041 = vmax.f32 %v765, 0.0
  %v1042 = vmax.f32 %v768, 0.0
  %v1043 = vmax.f32 %v770, 0.0
  %v1044 = vmax.f32 %v773, 0.0
  %v1045 = vmax.f32 %v775, 0.0
  %v1046 = vmax.f32 %v778, 0.0
  %v1047 = vmax.f32 %v780, 0.0
  %v1048 = vmax.f32 %v783, 0.0
  %v1049 = vmax.f32 %v785, 0.0
  %v1050 = vmax.f32 %v788, 0.0
  %v1051 = vmax.f32 %v790, 0.0
  %v1052 = vmax.f32 %v793, 0.0
  %v1053 = vmax.f32 %v795, 0.0
  %v1054 = vmax.f32 %v798, 0.0
  %v1055 = vmax.f32 %v800, 0.0
  %v1056 = vmax.f32 %v803, 0.0
  %v1057 = vmax.f32 %v805, 0.0
  %v1058 = vmax.f32 %v808, 0.0
  %v1059 = vmax.f32 %v810, 0.0
  %v1060 = vmax.f32 %v813, 0.0
  %v1061 = vmax.f32 %v815, 0.0
  %v1062 = vmax.f32 %v818, 0.0
  %v1063 = vmax.f32 %v820, 0.0
  %v1064 = vmax.f32 %v823, 0.0
  %v1065 = vmax.f32 %v825, 0.0
  %v1066 = vmax.f32 %v828, 0.0
  %v1067 = vmax.f32 %v830, 0.0
  %v1068 = vmax.f32 %v833, 0.0
  %v1069 = vmax.f32 %v835, 0.0
  %v1070 = vmax.f32 %v838, 0.0
  %v1071 = vmax.f32 %v840, 0.0
  %v1072 = vmax.f32 %v843, 0.0
  %v1073 = vmax.f32 %v845, 0.0
  %v1074 = vmax.f32 %v848, 0.0
  %v1075 = vmax.f32 %v850, 0.0
  %v1076 = vmax.f32 %v853, 0.0
  %v1077 = vmax.f32 %v855, 0.0
  %v1078 = vmax.f32 %v858, 0.0
  %v1079 = vmax.f32 %v860, 0.0
  %v1080 = vmax.f32 %v863, 0.0
  %v1081 = vmax.f32 %v865, 0.0
  %v1082 = vmax.f32 %v868, 0.0
  %v1083 = vmax.f32 %v870, 0.0
  %v1084 = vmax.f32 %v873, 0.0
  %v1085 = vmax.f32 %v875, 0.0
  %v1086 = vmax.f32 %v878, 0.0
  %v1087 = vmax.f32 %v880, 0.0
  %v1088 = vmax.f32 %v883, 0.0
  %v1089 = vmax.f32 %v885, 0.0
  %v1090 = vmax.f32 %v888, 0.0
  %v1091 = vmax.f32 %v890, 0.0
  %v1092 = vmax.f32 %v893, 0.0
  %v1093 = vmax.f32 %v895, 0.0
  %v1094 = vmax.f32 %v898, 0.0
  %v1095 = vmax.f32 %v900, 0.0
  %v1096 = vmax.f32 %v903, 0.0
  %v1097 = vmax.f32 %v905, 0.0
  %v1098 = vmax.f32 %v908, 0.0
  %v1099 = vmax.f32 %v910, 0.0
  %v1100 = vmax.f32 %v913, 0.0
  %v1101 = vmax.f32 %v915, 0.0
  %v1102 = vmax.f32 %v918, 0.0
  %v1103 = vmax.f32 %v920, 0.0
  %v1104 = vmax.f32 %v923, 0.0
  %v1105 = vmax.f32 %v925, 0.0
  %v1106 = vmax.f32 %v928, 0.0
  %v1107 = vmax.f32 %v930, 0.0
  %v1108 = vmax.f32 %v933, 0.0
  %v1109 = vmax.f32 %v935, 0.0
  %v1110 = vmax.f32 %v938, 0.0
  %v1111 = vmax.f32 %v940, 0.0
  %v1112 = vmax.f32 %v943, 0.0
  %v1113 = vmax.f32 %v945, 0.0
  %v1114 = vmax.f32 %v948, 0.0
  %v1115 = vmax.f32 %v950, 0.0
  %v1116 = vmax.f32 %v953, 0.0
  %v1117 = vmax.f32 %v955, 0.0
  %v1118 = vmax.f32 %v958, 0.0
  %v1119 = vmax.f32 %v960, 0.0
  %v1120 = vmax.f32 %v963, 0.0
  %v1121 = vmax.f32 %v965, 0.0
  %v1122 = vmax.f32 %v968, 0.0
  %v1123 = vmax.f32 %v970, 0.0
  %v1124 = vmax.f32 %v973, 0.0
  %v1125 = vmax.f32 %v975, 0.0
  %v1126 = vmax.f32 %v978, 0.0
  %v1127 = vmax.f32 %v980, 0.0
  %v1128 = vmax.f32 %v983, 0.0
  %v1129 = vmax.f32 %v985, 0.0
  %v1130 = vmax.f32 %v988, 0.0
  %v1131 = vmax.f32 %v990, 0.0
  %v1132 = vmax.f32 %v993, 0.0
  %v1133 = vmax.f32 %v995, 0.0
  %v1134 = vmax.f32 %v998, 0.0
  %v1135 = vmax.f32 %v1000, 0.0
  %v1136 = vmax.f32 %v1003, 0.0
  %v1137 = vmax.f32 %v1005, 0.0
  %v1138 = vmax.f32 %v1008, 0.0
  %v1139 = vmax.f32 %v1010, 0.0
  %v1140 = vadd.f32 %v1012, %v1013
  %v1141 = vadd.f32 %v1140, %v1014
  %v1142 = vadd.f32 %v1141, %v1015
  %v1143 = vadd.f32 %v1142, %v1016
  %v1144 = vadd.f32 %v1143, %v1017
  %v1145 = vadd.f32 %v1144, %v1018
  %v1146 = vadd.f32 %v1145, %v1019
  %v1147 = vadd.f32 %v1146, %v1020
  %v1148 = vadd.f32 %v1147, %v1021
  %v1149 = vadd.f32 %v1148, %v1022
  %v1150 = vadd.f32 %v1149, %v1023
  %v1151 = vadd.f32 %v1150, %v1024
  %v1152 = vadd.f32 %v1151, %v1025
  %v1153 = vadd.f32 %v1152, %v1026
  %v1154 = vadd.f32 %v1153, %v1027
  %v1155 = vadd.f32 %v1154, %v1028
  %v1156 = vadd.f32 %v1155, %v1029
  %v1157 = vadd.f32 %v1156, %v1030
  %v1158 = vadd.f32 %v1157, %v1031
  %v1159 = vadd.f32 %v1158, %v1032
  %v1160 = vadd.f32 %v1159, %v1033
  %v1161 = vadd.f32 %v1160, %v1034
  %v1162 = vadd.f32 %v1161, %v1035
  %v1163 = vadd.f32 %v1162, %v1036
  %v1164 = vadd.f32 %v1163, %v1037
  %v1165 = vadd.f32 %v1164, %v1038
  %v1166 = vadd.f32 %v1165, %v1039
  %v1167 = vadd.f32 %v1166, %v1040
  %v1168 = vadd.f32 %v1167, %v1041
  %v1169 = vadd.f32 %v1168, %v1042
  %v1170 = vadd.f32 %v1169, %v1043
  %v1171 = vrot.slane %v1170, 4
  %v1172 = vadd.f32 %v1170, %v1171
  %v1173 = vrot.slane %v1172, 2
  %v1174 = vadd.f32 %v1172, %v1173
  %v1175 = vrot.slane %v1174, 1
  %v1176 = vadd.f32 %v1174, %v1175
  %v1177 = vadd.f32 %v1044, %v1045
  %v1178 = vadd.f32 %v1177, %v1046
  %v1179 = vadd.f32 %v1178, %v1047
  %v1180 = vadd.f32 %v1179, %v1048
  %v1181 = vadd.f32 %v1180, %v1049
  %v1182 = vadd.f32 %v1181, %v1050
  %v1183 = vadd.f32 %v1182, %v1051
  %v1184 = vadd.f32 %v1183, %v1052
  %v1185 = vadd.f32 %v1184, %v1053
  %v1186 = vadd.f32 %v1185, %v1054
  %v1187 = vadd.f32 %v1186, %v1055
  %v1188 = vadd.f32 %v1187, %v1056
  %v1189 = vadd.f32 %v1188, %v1057
  %v1190 = vadd.f32 %v1189, %v1058
  %v1191 = vadd.f32 %v1190, %v1059
  %v1192 = vadd.f32 %v1191, %v1060
  %v1193 = vadd.f32 %v1192, %v1061
  %v1194 = vadd.f32 %v1193, %v1062
  %v1195 = vadd.f32 %v1194, %v1063
  %v1196 = vadd.f32 %v1195, %v1064
  %v1197 = vadd.f32 %v1196, %v1065
  %v1198 = vadd.f32 %v1197, %v1066
  %v1199 = vadd.f32 %v1198, %v1067
  %v1200 = vadd.f32 %v1199, %v1068
  %v1201 = vadd.f32 %v1200, %v1069
  %v1202 = vadd.f32 %v1201, %v1070
  %v1203 = vadd.f32 %v1202, %v1071
  %v1204 = vadd.f32 %v1203, %v1072
  %v1205 = vadd.f32 %v1204, %v1073
  %v1206 = vadd.f32 %v1205, %v1074
  %v1207 = vadd.f32 %v1206, %v1075
  %v1208 = vrot.slane %v1207, 4
  %v1209 = vadd.f32 %v1207, %v1208
  %v1210 = vrot.slane %v1209, 2
  %v1211 = vadd.f32 %v1209, %v1210
  %v1212 = vrot.slane %v1211, 1
  %v1213 = vadd.f32 %v1211, %v1212
  %v1214 = vadd.f32 %v1076, %v1077
  %v1215 = vadd.f32 %v1214, %v1078
  %v1216 = vadd.f32 %v1215, %v1079
  %v1217 = vadd.f32 %v1216, %v1080
  %v1218 = vadd.f32 %v1217, %v1081
  %v1219 = vadd.f32 %v1218, %v1082
  %v1220 = vadd.f32 %v1219, %v1083
  %v1221 = vadd.f32 %v1220, %v1084
  %v1222 = vadd.f32 %v1221, %v1085
  %v1223 = vadd.f32 %v1222, %v1086
  %v1224 = vadd.f32 %v1223, %v1087
  %v1225 = vadd.f32 %v1224, %v1088
  %v1226 = vadd.f32 %v1225, %v1089
  %v1227 = vadd.f32 %v1226, %v1090
  %v1228 = vadd.f32 %v1227, %v1091
  %v1229 = vadd.f32 %v1228, %v1092
  %v1230 = vadd.f32 %v1229, %v1093
  %v1231 = vadd.f32 %v1230, %v1094
  %v1232 = vadd.f32 %v1231, %v1095
  %v1233 = vadd.f32 %v1232, %v1096
  %v1234 = vadd.f32 %v1233, %v1097
  %v1235 = vadd.f32 %v1234, %v1098
  %v1236 = vadd.f32 %v1235, %v1099
  %v1237 = vadd.f32 %v1236, %v1100
  %v1238 = vadd.f32 %v1237, %v1101
  %v1239 = vadd.f32 %v1238, %v1102
  %v1240 = vadd.f32 %v1239, %v1103
  %v1241 = vadd.f32 %v1240, %v1104
  %v1242 = vadd.f32 %v1241, %v1105
  %v1243 = vadd.f32 %v1242, %v1106
  %v1244 = vadd.f32 %v1243, %v1107
  %v1245 = vrot.slane %v1244, 4
  %v1246 = vadd.f32 %v1244, %v1245
  %v1247 = vrot.slane %v1246, 2
  %v1248 = vadd.f32 %v1246, %v1247
  %v1249 = vrot.slane %v1248, 1
  %v1250 = vadd.f32 %v1248, %v1249
  %v1251 = vadd.f32 %v1108, %v1109
  %v1252 = vadd.f32 %v1251, %v1110
  %v1253 = vadd.f32 %v1252, %v1111
  %v1254 = vadd.f32 %v1253, %v1112
  %v1255 = vadd.f32 %v1254, %v1113
  %v1256 = vadd.f32 %v1255, %v1114
  %v1257 = vadd.f32 %v1256, %v1115
  %v1258 = vadd.f32 %v1257, %v1116
  %v1259 = vadd.f32 %v1258, %v1117
  %v1260 = vadd.f32 %v1259, %v1118
  %v1261 = vadd.f32 %v1260, %v1119
  %v1262 = vadd.f32 %v1261, %v1120
  %v1263 = vadd.f32 %v1262, %v1121
  %v1264 = vadd.f32 %v1263, %v1122
  %v1265 = vadd.f32 %v1264, %v1123
  %v1266 = vadd.f32 %v1265, %v1124
  %v1267 = vadd.f32 %v1266, %v1125
  %v1268 = vadd.f32 %v1267, %v1126
  %v1269 = vadd.f32 %v1268, %v1127
  %v1270 = vadd.f32 %v1269, %v1128
  %v1271 = vadd.f32 %v1270, %v1129
  %v1272 = vadd.f32 %v1271, %v1130
  %v1273 = vadd.f32 %v1272, %v1131
  %v1274 = vadd.f32 %v1273, %v1132
  %v1275 = vadd.f32 %v1274, %v1133
  %v1276 = vadd.f32 %v1275, %v1134
  %v1277 = vadd.f32 %v1276, %v1135
  %v1278 = vadd.f32 %v1277, %v1136
  %v1279 = vadd.f32 %v1278, %v1137
  %v1280 = vadd.f32 %v1279, %v1138
  %v1281 = vadd.f32 %v1280, %v1139
  %v1282 = vrot.slane %v1281, 4
  %v1283 = vadd.f32 %v1281, %v1282
  %v1284 = vrot.slane %v1283, 2
  %v1285 = vadd.f32 %v1283, %v1284
  %v1286 = vrot.slane %v1285, 1
  %v1287 = vadd.f32 %v1285, %v1286
  %v1288 = vmul.f32 %v1176, 0.00390625
  %v1289 = vmul.f32 %v1213, 0.00390625
  %v1290 = vmul.f32 %v1250, 0.00390625
  %v1291 = vmul.f32 %v1287, 0.00390625
  %v1292 = vld [vmem:[%s3] sm:$0xff]
  %v1293 = vpack.c.bf16 %v1288, %v1288
  %v1294 = vpack.c.bf16 %v1289, %v1289
  %v1295 = vpack.c.bf16 %v1290, %v1290
  %v1296 = vpack.c.bf16 %v1291, %v1291
  %v1297 = vld [vmem:[%s2] sm:$0xf]
  %v1298 = vld [vmem:[%s2 + $0x4] sm:$0xf]
  %v1299 = vld [vmem:[%s2 + $0x8] sm:$0xf]
  %v1300 = vld [vmem:[%s2 + $0xc] sm:$0xf]
  %v1305 = vunpack.c.l.b16 %v1293
  %v1306 = vunpack.c.l.b16 %v1294
  %v1307 = vunpack.c.l.b16 %v1295
  %v1308 = vunpack.c.l.b16 %v1296
  %vm1309 = vcmask 1041409
  %v1310 = vsel %vm1309, %v1306, %v1305
  %vm1311 = vcmask 1042434
  %v1312 = vsel %vm1311, %v1307, %v1310
  %vm1313 = vcmask 1043459
  %v1314 = vsel %vm1313, %v1308, %v1312
  %v1315 = vpack.c.b16 %v1314, %v1314
  %v1320 = vunpack.c.l.b16 %v1297
  %v1321 = vunpack.c.l.b16 %v1298
  %v1322 = vunpack.c.l.b16 %v1299
  %v1323 = vunpack.c.l.b16 %v1300
  %v1324 = vpack.c.b16 %v1321, %v1320
  %v1325 = vpack.c.b16 %v1323, %v1322
  %vm1328 = vcmask 261120
  %v1330 = vsel %vm1328, %v1315, 0
  %1332 = vmatpush.bf16.msra.mxu0 0
  %1333 = vmatpush.bf16.msra.mxu0 0
  %1334 = vmatpush.bf16.msra.mxu0 0
  %1335 = vmatpush.bf16.msra.mxu0 0
  %1336 = vmatpush.bf16.msra.mxu0 0
  %1337 = vmatpush.bf16.msra.mxu0 0
  %1338 = vmatpush.bf16.msra.mxu0 %v1325
  %1339 = vmatpush.bf16.msra.mxu0 %v1324
  %1340 = vmatmul.bf16.gmra.mxu0 %v1330
  %v1341 = vpop.f32.mrf.mxu0
  %v1342 = vadd.f32 0.0, %v1341
  %v1343 = vpop.f32.mrf.mxu0
  %1344 = vdwg.mxu0
  %v1345 = vperm.slane %v1292, 0
  %v1346 = vmul.f32 %v1342, %v1345
  %v1347 = vperm.slane %v1292, 1
  %v1348 = vadd.f32 %v1346, %v1347
  %v1349 = vmax.f32 %v1348, 0.0
  %v1350 = vpack.c.bf16 %v1349, %v1349
  %v1351 = vld [vmem:[%s2 + $0x10] sm:$0xf]
  %v1352 = vld [vmem:[%s2 + $0x14] sm:$0xf]
  %v1353 = vld [vmem:[%s2 + $0x18] sm:$0xf]
  %v1354 = vld [vmem:[%s2 + $0x1c] sm:$0xf]
  %v1359 = vunpack.c.l.b16 %v1351
  %v1360 = vunpack.c.l.b16 %v1352
  %v1361 = vunpack.c.l.b16 %v1353
  %v1362 = vunpack.c.l.b16 %v1354
  %v1363 = vpack.c.b16 %v1360, %v1359
  %v1364 = vpack.c.b16 %v1362, %v1361
  %v1368 = vsel %vm1328, %v1350, 0
  %1370 = vmatpush.bf16.msra.mxu0 0
  %1371 = vmatpush.bf16.msra.mxu0 0
  %1372 = vmatpush.bf16.msra.mxu0 0
  %1373 = vmatpush.bf16.msra.mxu0 0
  %1374 = vmatpush.bf16.msra.mxu0 0
  %1375 = vmatpush.bf16.msra.mxu0 0
  %1376 = vmatpush.bf16.msra.mxu0 %v1364
  %1377 = vmatpush.bf16.msra.mxu0 %v1363
  %1378 = vmatmul.bf16.gmra.mxu0 %v1368
  %v1379 = vpop.f32.mrf.mxu0
  %v1380 = vadd.f32 0.0, %v1379
  %v1381 = vpop.f32.mrf.mxu0
  %1382 = vdwg.mxu0
  %v1383 = vperm.slane %v1292, 2
  %v1384 = vmul.f32 %v1380, %v1383
  %v1385 = vperm.slane %v1292, 3
  %v1386 = vadd.f32 %v1384, %v1385
  %v1387 = vmax.f32 %v1386, 0.0
  %v1388 = vpack.c.bf16 %v1387, %v1387
  %v1389 = vld [vmem:[%s2 + $0x20] sm:$0xf]
  %v1390 = vld [vmem:[%s2 + $0x24] sm:$0xf]
  %v1391 = vld [vmem:[%s2 + $0x28] sm:$0xf]
  %v1392 = vld [vmem:[%s2 + $0x2c] sm:$0xf]
  %v1397 = vunpack.c.l.b16 %v1389
  %v1398 = vunpack.c.l.b16 %v1390
  %v1399 = vunpack.c.l.b16 %v1391
  %v1400 = vunpack.c.l.b16 %v1392
  %v1401 = vpack.c.b16 %v1398, %v1397
  %v1402 = vpack.c.b16 %v1400, %v1399
  %v1406 = vsel %vm1328, %v1388, 0
  %1408 = vmatpush.bf16.msra.mxu0 0
  %1409 = vmatpush.bf16.msra.mxu0 0
  %1410 = vmatpush.bf16.msra.mxu0 0
  %1411 = vmatpush.bf16.msra.mxu0 0
  %1412 = vmatpush.bf16.msra.mxu0 0
  %1413 = vmatpush.bf16.msra.mxu0 0
  %1414 = vmatpush.bf16.msra.mxu0 %v1402
  %1415 = vmatpush.bf16.msra.mxu0 %v1401
  %1416 = vmatmul.bf16.gmra.mxu0 %v1406
  %v1417 = vpop.f32.mrf.mxu0
  %v1418 = vadd.f32 0.0, %v1417
  %v1419 = vpop.f32.mrf.mxu0
  %1420 = vdwg.mxu0
  %v1421 = vperm.slane %v1292, 4
  %v1422 = vmul.f32 %v1418, %v1421
  %v1423 = vperm.slane %v1292, 5
  %v1424 = vadd.f32 %v1422, %v1423
  %v1426 = vrot.slane %v1424, 2
  %v1428 = vmul.f32 %v1424, %v1426
  %v1429 = vsel %vm679, %v1428, 0.0
  %1430 = vadd.xlane.f32.xlu0 %v1429
  %v1431 = vpop.xlane.xlu0 %1430
  %v1432 = vmul.f32 %v1424, %v1424
  %v1433 = vsel %vm679, %v1432, 0.0
  %1434 = vadd.xlane.f32.xlu0 %v1433
  %v1435 = vpop.xlane.xlu0 %1434
  %v1436 = vrsqrt.pop %v1435
  %v1437 = vmul.f32 %v1436, %v1435
  %v1438 = vmul.f32 %v1437, %v1436
  %v1439 = vmul.f32 0.5, %v1438
  %v1440 = vsub.f32 1.5, %v1439
  %v1441 = vmul.f32 %v1436, %v1440
  %v1442 = vmul.f32 %v1435, %v1441
  %vm1443 = vcmp.eq.f32.partialorder %v1435, inf
  %v1444 = vsel %vm1443, %v1435, %v1442
  %vm1445 = vcmp.eq.f32.partialorder %v1435, 0.0
  %v1446 = vand.u32 %v1435, 2147483648
  %v1447 = vsel %vm1445, %v1446, %v1444
  %vm1448 = vcmask 1043458
  %v1449 = vsel %vm1448, %v1432, 0.0
  %1450 = vadd.xlane.f32.xlu0 %v1449
  %v1451 = vpop.xlane.xlu0 %1450
  %v1452 = vrsqrt.pop %v1451
  %v1453 = vmul.f32 %v1452, %v1451
  %v1454 = vmul.f32 %v1453, %v1452
  %v1455 = vmul.f32 0.5, %v1454
  %v1456 = vsub.f32 1.5, %v1455
  %v1457 = vmul.f32 %v1452, %v1456
  %v1458 = vmul.f32 %v1451, %v1457
  %vm1459 = vcmp.eq.f32.partialorder %v1451, inf
  %v1460 = vsel %vm1459, %v1451, %v1458
  %vm1461 = vcmp.eq.f32.partialorder %v1451, 0.0
  %v1462 = vand.u32 %v1451, 2147483648
  %v1463 = vsel %vm1461, %v1462, %v1460
  %v1465 = vrot.slane %v1463, 2
  %v1467 = vmul.f32 %v1447, %v1465
  %v1468 = vmax.f32 %v1467, 1e-08
  %v1469 = vrcp.pop %v1468
  %v1470 = vmul.f32 %v1468, %v1469
  %v1471 = vsub.f32 1.0, %v1470
  %v1472 = vmul.f32 %v1469, %v1471
  %v1473 = vadd.f32 %v1469, %v1472
  %vm1474 = vweird.f32 %v1468
  %vm1475 = vweird.f32 %v1469
  %vm1476 = vmor %vm1474, %vm1475
  %v1477 = vsel %vm1476, %v1469, %v1473
  %v1478 = vand.u32 2147483647, %v1468
  %vm1479 = vcmp.eq.f32.partialorder %v1478, 8.507059e+37
  %v1480 = vand.u32 %v1468, 2147483648
  %v1481 = vor.u32 1.1754944e-38, %v1480
  %v1482 = vsel %vm1479, %v1481, %v1477
  %v1483 = vmul.f32 %v1431, %v1482
  %1485 = vset.pattern.permute.xlu0 0
  %1486 = vperm.xlu0 %1485, %v1483
  %v1487 = vpop.permute.xlu0 %1486
  %1489 = vst [vmem:[%s4] sm:$0x3] %v1487
  // Predicated region
  $region18: #{simsiam_forward.1} parent=0 // pred_check
    _
  $region19: #{simsiam_forward.1} parent=0 // pred_check_branch
    %1491 = sbr.rel (0) target = $region21
  $region20: #{simsiam_forward.1} parent=0 // pred_region
    _
  $region21: #{simsiam_forward.1} parent=0 // pred_fallthru
    _
  // Predicated region
  $region22: #{simsiam_forward.1} parent=0 // pred_check
    _
  $region23: #{simsiam_forward.1} parent=0 // pred_check_branch
    %1493 = sbr.rel (0) target = $region25
  $region24: #{simsiam_forward.1} parent=0 // pred_region
    _
  $region25: #{simsiam_forward.1} parent=0 // pred_fallthru
    _

</llo_original>
